<compile_context>
chip_gen: v7x
topology: tpu7x:2x2x1
jax: 0.10.0
libtpu: 0.0.40
codegen_flags: <defaults>
</compile_context>

<pallas_src>
import math
import functools

import jax
import jax.numpy as jnp
from jax.experimental import pallas as pl
from jax.experimental.pallas import tpu as pltpu


MAX_BATCH_TILE = 2048    # per-step batch tile cap (VMEM-safe on v5e/v6e/v7x)


# ----------------------------------------------------------------------------
# Fused kernel: both 3-layer MLP heads + folded 2-way softmax.
# ----------------------------------------------------------------------------
def classifier_kernel(*refs, with_noise):
    if with_noise:
        (s_sas_ref, a_sas_ref, ns_sas_ref, s_sa_ref, a_sa_ref) = refs[:5]
        rest = refs[5:]
    else:
        (s_sas_ref, a_sas_ref, ns_sas_ref) = refs[:3]
        s_sa_ref, a_sa_ref = s_sas_ref, a_sas_ref
        rest = refs[3:]

    (sas_w1s_ref, sas_w1a_ref, sas_w1ns_ref, sas_b1_ref,
     sas_w2_ref, sas_b2_ref, sas_w3d_ref, sas_b3d_ref,
     sa_w1s_ref, sa_w1a_ref, sa_b1_ref,
     sa_w2_ref, sa_b2_ref, sa_w3d_ref, sa_b3d_ref,
     o_sas_ref, o_sa_ref) = rest

    # Load activations once (f32), cast to bf16 only at MXU inputs.
    s_sas = s_sas_ref[...].astype(jnp.float32)
    a_sas = a_sas_ref[...].astype(jnp.float32)
    ns_sas = ns_sas_ref[...].astype(jnp.float32)
    if with_noise:
        s_sa = s_sa_ref[...].astype(jnp.float32)
        a_sa = a_sa_ref[...].astype(jnp.float32)
    else:
        s_sa, a_sa = s_sas, a_sas

    def head(x_parts, w1_part_refs, b1_ref, w2_ref, b2_ref,
             w3d_ref, b3d_ref, o_ref):
        # First layer as a sum of row-split matmuls (== concat @ W1).
        acc = None
        for xp, wp in zip(x_parts, w1_part_refs):
            d = jnp.dot(xp.astype(jnp.bfloat16), wp[...],
                        preferred_element_type=jnp.float32)
            acc = d if acc is None else acc + d
        h1 = jnp.maximum(acc + b1_ref[...], 0.0)

        h2 = jnp.dot(h1.astype(jnp.bfloat16), w2_ref[...],
                     preferred_element_type=jnp.float32) + b2_ref[...]
        h2 = jnp.maximum(h2, 0.0)

        # Folded 2-class softmax: d = l1 - l0, p1 = sigmoid(d), p0 = 1 - p1.
        d = jnp.dot(h2.astype(jnp.bfloat16), w3d_ref[...],
                    preferred_element_type=jnp.float32) + b3d_ref[...]
        p1 = 1.0 / (1.0 + jnp.exp(-d))
        p0 = 1.0 - p1
        o_ref[...] = jnp.concatenate([p0, p1], axis=-1).astype(o_ref.dtype)

    head((s_sas, a_sas, ns_sas),
         (sas_w1s_ref, sas_w1a_ref, sas_w1ns_ref),
         sas_b1_ref, sas_w2_ref, sas_b2_ref, sas_w3d_ref, sas_b3d_ref,
         o_sas_ref)

    head((s_sa, a_sa),
         (sa_w1s_ref, sa_w1a_ref),
         sa_b1_ref, sa_w2_ref, sa_b2_ref, sa_w3d_ref, sa_b3d_ref,
         o_sa_ref)


# ----------------------------------------------------------------------------
# Batch tile choice: multiple-of-8, VMEM-capped, >= 2 grid steps when B >= 16
# so the "parallel" batch axis can use both TensorCores on v7x.
# ----------------------------------------------------------------------------
def _choose_batch_tile(B, batch_tile):
    batch_tile = max(8, (int(batch_tile) // 8) * 8)   # clamp to multiple of 8
    if B <= batch_tile:
        if B < 16:
            return B                                  # single full-batch block
        half = (B + 1) // 2
        return min(batch_tile, ((half + 7) // 8) * 8)  # guarantees grid >= 2
    return batch_tile


# ----------------------------------------------------------------------------
# Wrapper: single fused pallas_call over a batch grid.
# ----------------------------------------------------------------------------
def classifier_forward(params, state, action, nextstate, with_noise,
                       seed=0, gaussian_noise_std=1.0,
                       batch_tile=MAX_BATCH_TILE):
    B, S = state.shape
    A = action.shape[1]

    sas_params = params["sas"]   # (w1_s, w1_a, w1_ns, b1, w2, b2, w3d, b3d)
    sa_params = params["sa"]     # (w1_s, w1_a, b1, w2, b2, w3d, b3d)
    H = sas_params[4].shape[0]   # w2 is (H, H)

    if with_noise:
        # Independent N(0, std) noise per element / per head (== torch.randn_like
        # on each concatenated input).
        key = jax.random.PRNGKey(int(seed))
        k1, k2, k3, k4, k5 = jax.random.split(key, 5)
        std = float(gaussian_noise_std)
        acts = (state + std * jax.random.normal(k1, state.shape, state.dtype),
                action + std * jax.random.normal(k2, action.shape, action.dtype),
                nextstate + std * jax.random.normal(k3, nextstate.shape,
                                                    nextstate.dtype),
                state + std * jax.random.normal(k4, state.shape, state.dtype),
                action + std * jax.random.normal(k5, action.shape, action.dtype))
    else:
        acts = (state, action, nextstate)

    TB = _choose_batch_tile(B, batch_tile)
    grid = (pl.cdiv(B, TB),)

    def bmap(i):    # batch-tiled operands / outputs
        return (i, 0)

    def wmap(i):    # weights / biases stay VMEM-resident
        return (0, 0)

    act_shapes = [(TB, S), (TB, A), (TB, S)]
    if with_noise:
        act_shapes += [(TB, S), (TB, A)]

    in_specs = ([pl.BlockSpec(shp, bmap) for shp in act_shapes]
                + [pl.BlockSpec(p.shape, wmap) for p in sas_params]
                + [pl.BlockSpec(p.shape, wmap) for p in sa_params])
    out_specs = (pl.BlockSpec((TB, 2), bmap), pl.BlockSpec((TB, 2), bmap))
    out_shape = (jax.ShapeDtypeStruct((B, 2), jnp.float32),
                 jax.ShapeDtypeStruct((B, 2), jnp.float32))

    # Advisory cost estimate for XLA scheduling around the fused call.
    flops = B * (2 * (3 * S + 2 * A) * H + 4 * H * H + 4 * H)
    bytes_accessed = int(
        sum(int(a.size) * a.dtype.itemsize for a in acts)
        + sum(int(p.size) * p.dtype.itemsize for p in sas_params + sa_params)
        + 2 * B * 2 * 4)
    cost = pl.CostEstimate(flops=int(flops), transcendentals=int(2 * B),
                           bytes_accessed=bytes_accessed)

    kernel = functools.partial(classifier_kernel, with_noise=bool(with_noise))

    sas_probs, sa_probs = pl.pallas_call(
        kernel,
        out_shape=out_shape,
        grid=grid,
        in_specs=in_specs,
        out_specs=out_specs,
        compiler_params=pltpu.CompilerParams(
            dimension_semantics=("parallel",),
            vmem_limit_bytes=48 * 1024 * 1024),
        cost_estimate=cost,
    )(*acts, *sas_params, *sa_params)

    return sas_probs, sa_probs


# ----------------------------------------------------------------------------
# Parameter init (PyTorch nn.Linear default: U(-1/sqrt(fan_in), 1/sqrt(fan_in))).
# Kernel params: first-layer weights pre-split by input component (bf16),
# last layer folded to a single diff column (2-class softmax == sigmoid).
# Full-precision params kept separately for the pure-JAX reference.
# ----------------------------------------------------------------------------
def _init_linear(key, in_dim, out_dim):
    kw, kb = jax.random.split(key)
    bound = 1.0 / math.sqrt(in_dim)
    w = jax.random.uniform(kw, (in_dim, out_dim), jnp.float32, -bound, bound)
    b = jax.random.uniform(kb, (1, out_dim), jnp.float32, -bound, bound)
    return w, b


def _init_head(key, part_dims, hidden):
    in_dim = sum(part_dims)
    k1, k2, k3 = jax.random.split(key, 3)
    w1, b1 = _init_linear(k1, in_dim, hidden)
    w2, b2 = _init_linear(k2, hidden, hidden)
    w3, b3 = _init_linear(k3, hidden, 2)

    parts, off = [], 0
    for d in part_dims:
        parts.append(w1[off:off + d].astype(jnp.bfloat16))
        off += d
    w3d = (w3[:, 1:2] - w3[:, 0:1]).astype(jnp.bfloat16)
    b3d = b3[:, 1:2] - b3[:, 0:1]

    kernel_params = tuple(parts) + (b1, w2.astype(jnp.bfloat16), b2, w3d, b3d)
    ref_params = (w1, b1, w2, b2, w3, b3)
    return kernel_params, ref_params


def init_classifier(key, state_dim, action_dim, hidden):
    k_sa, k_sas = jax.random.split(key)
    sa_k, sa_ref = _init_head(k_sa, (state_dim, action_dim), hidden)
    sas_k, sas_ref = _init_head(k_sas, (state_dim, action_dim, state_dim), hidden)
    return ({"sa": sa_k, "sas": sas_k}, {"sa": sa_ref, "sas": sas_ref})


# ----------------------------------------------------------------------------
# Pure-JAX references.
# ----------------------------------------------------------------------------
def _reference_forward_f32(ref_params, state, action, nextstate):
    def head(x, p):
        w1, b1, w2, b2, w3, b3 = p
        h = jnp.maximum(x @ w1 + b1, 0.0)
        h = jnp.maximum(h @ w2 + b2, 0.0)
        return jax.nn.softmax(h @ w3 + b3, axis=-1)

    sas = head(jnp.concatenate([state, action, nextstate], -1), ref_params["sas"])
    sa = head(jnp.concatenate([state, action], -1), ref_params["sa"])
    return sas, sa


def _reference_forward_matched(kparams, state, action, nextstate):
    # Same bf16-MXU-input math as the kernel (tight-tolerance check).
    def head(x_parts, p, n_parts):
        w1_parts = p[:n_parts]
        b1, w2, b2, w3d, b3d = p[n_parts:]
        h = sum(jnp.dot(x.astype(jnp.bfloat16), w,
                        preferred_element_type=jnp.float32)
                for x, w in zip(x_parts, w1_parts)) + b1
        h = jnp.maximum(h, 0.0)
        h = jnp.maximum(jnp.dot(h.astype(jnp.bfloat16), w2,
                                preferred_element_type=jnp.float32) + b2, 0.0)
        d = jnp.dot(h.astype(jnp.bfloat16), w3d,
                    preferred_element_type=jnp.float32) + b3d
        p1 = 1.0 / (1.0 + jnp.exp(-d))
        return jnp.concatenate([1.0 - p1, p1], -1)

    sas = head((state, action, nextstate), kparams["sas"], 3)
    sa = head((state, action), kparams["sa"], 2)
    return sas, sa


if __name__ == "__main__":
    B, STATE_DIM, ACTION_DIM, HIDDEN = 2, 10, 4, 32

    root = jax.random.PRNGKey(0)
    k_params, k_s, k_a, k_ns = jax.random.split(root, 4)

    kparams, refparams = init_classifier(k_params, STATE_DIM, ACTION_DIM, HIDDEN)

    state = jax.random.normal(k_s, (B, STATE_DIM), jnp.float32)
    action = jax.random.normal(k_a, (B, ACTION_DIM), jnp.float32)
    nextstate = jax.random.normal(k_ns, (B, STATE_DIM), jnp.float32)

    # --- with_noise=False path ---
    sas_p, sa_p = classifier_forward(kparams, state, action, nextstate,
                                     with_noise=False)
    jax.block_until_ready((sas_p, sa_p))

    assert sas_p.shape == (B, 2) and sa_p.shape == (B, 2)
    assert jnp.allclose(jnp.sum(sas_p, -1), 1.0, atol=1e-5)
    assert jnp.allclose(jnp.sum(sa_p, -1), 1.0, atol=1e-5)
    assert bool(jnp.all(sas_p >= 0.0)) and bool(jnp.all(sa_p >= 0.0))

    m_sas, m_sa = _reference_forward_matched(kparams, state, action, nextstate)
    assert jnp.allclose(sas_p, m_sas, atol=1e-3, rtol=1e-3)
    assert jnp.allclose(sa_p, m_sa, atol=1e-3, rtol=1e-3)

    f_sas, f_sa = _reference_forward_f32(refparams, state, action, nextstate)
    assert jnp.allclose(sas_p, f_sas, atol=2e-2, rtol=2e-2)
    assert jnp.allclose(sa_p, f_sa, atol=2e-2, rtol=2e-2)

    # --- with_noise=True path (noise drawn in wrapper, added before the kernel) ---
    sas_pn, sa_pn = classifier_forward(kparams, state, action, nextstate,
                                       with_noise=True, seed=1234,
                                       gaussian_noise_std=1.0)
    jax.block_until_ready((sas_pn, sa_pn))
    assert jnp.allclose(jnp.sum(sas_pn, -1), 1.0, atol=1e-5)
    assert jnp.allclose(jnp.sum(sa_pn, -1), 1.0, atol=1e-5)
    assert bool(jnp.all(sas_pn >= 0.0)) and bool(jnp.all(sa_pn >= 0.0))

    # --- larger batch: exercises multi-step grid (>= 2 tiles) + tail padding ---
    B2 = 20
    ks2, ka2, kn2 = jax.random.split(jax.random.PRNGKey(7), 3)
    state2 = jax.random.normal(ks2, (B2, STATE_DIM), jnp.float32)
    action2 = jax.random.normal(ka2, (B2, ACTION_DIM), jnp.float32)
    nextstate2 = jax.random.normal(kn2, (B2, STATE_DIM), jnp.float32)

    sas_p2, sa_p2 = classifier_forward(kparams, state2, action2, nextstate2,
                                       with_noise=False)
    jax.block_until_ready((sas_p2, sa_p2))
    m_sas2, m_sa2 = _reference_forward_matched(kparams, state2, action2, nextstate2)
    assert sas_p2.shape == (B2, 2) and sa_p2.shape == (B2, 2)
    assert jnp.allclose(sas_p2, m_sas2, atol=1e-3, rtol=1e-3)
    assert jnp.allclose(sa_p2, m_sa2, atol=1e-3, rtol=1e-3)

    print("KERNEL_OK")
</pallas_src>

<mosaic_0001>
module attributes {stable_mosaic.version = 11 : i64} {
  func.func @classifier_kernel(%arg0: i32, %arg1: memref<2x10xf32, #tpu.memory_space<vmem>>, %arg2: memref<2x4xf32, #tpu.memory_space<vmem>>, %arg3: memref<2x10xf32, #tpu.memory_space<vmem>>, %arg4: memref<10x32xbf16, #tpu.memory_space<vmem>>, %arg5: memref<4x32xbf16, #tpu.memory_space<vmem>>, %arg6: memref<10x32xbf16, #tpu.memory_space<vmem>>, %arg7: memref<1x32xf32, #tpu.memory_space<vmem>>, %arg8: memref<32x32xbf16, #tpu.memory_space<vmem>>, %arg9: memref<1x32xf32, #tpu.memory_space<vmem>>, %arg10: memref<32x1xbf16, #tpu.memory_space<vmem>>, %arg11: memref<1x1xf32, #tpu.memory_space<vmem>>, %arg12: memref<10x32xbf16, #tpu.memory_space<vmem>>, %arg13: memref<4x32xbf16, #tpu.memory_space<vmem>>, %arg14: memref<1x32xf32, #tpu.memory_space<vmem>>, %arg15: memref<32x32xbf16, #tpu.memory_space<vmem>>, %arg16: memref<1x32xf32, #tpu.memory_space<vmem>>, %arg17: memref<32x1xbf16, #tpu.memory_space<vmem>>, %arg18: memref<1x1xf32, #tpu.memory_space<vmem>>, %arg19: memref<2x2xf32, #tpu.memory_space<vmem>>, %arg20: memref<2x2xf32, #tpu.memory_space<vmem>>) attributes {dimension_semantics = [#tpu.dimension_semantics<parallel>], iteration_bounds = array<i64: 1>, scalar_prefetch = 0 : i64, scratch_operands = 0 : i64, tpu.core_type = #tpu.core_type<tc>, window_params = [{transform_indices = @transform_0, window_bounds = array<i64: 2, 10>}, {transform_indices = @transform_1, window_bounds = array<i64: 2, 4>}, {transform_indices = @transform_2, window_bounds = array<i64: 2, 10>}, {pipeline_mode = #tpu.pipeline_mode<synchronous>, transform_indices = @transform_3, window_bounds = array<i64: 10, 32>}, {pipeline_mode = #tpu.pipeline_mode<synchronous>, transform_indices = @transform_4, window_bounds = array<i64: 4, 32>}, {pipeline_mode = #tpu.pipeline_mode<synchronous>, transform_indices = @transform_5, window_bounds = array<i64: 10, 32>}, {pipeline_mode = #tpu.pipeline_mode<synchronous>, transform_indices = @transform_6, window_bounds = array<i64: 1, 32>}, {pipeline_mode = #tpu.pipeline_mode<synchronous>, transform_indices = @transform_7, window_bounds = array<i64: 32, 32>}, {pipeline_mode = #tpu.pipeline_mode<synchronous>, transform_indices = @transform_8, window_bounds = array<i64: 1, 32>}, {pipeline_mode = #tpu.pipeline_mode<synchronous>, transform_indices = @transform_9, window_bounds = array<i64: 32, 1>}, {pipeline_mode = #tpu.pipeline_mode<synchronous>, transform_indices = @transform_10, window_bounds = array<i64: 1, 1>}, {pipeline_mode = #tpu.pipeline_mode<synchronous>, transform_indices = @transform_11, window_bounds = array<i64: 10, 32>}, {pipeline_mode = #tpu.pipeline_mode<synchronous>, transform_indices = @transform_12, window_bounds = array<i64: 4, 32>}, {pipeline_mode = #tpu.pipeline_mode<synchronous>, transform_indices = @transform_13, window_bounds = array<i64: 1, 32>}, {pipeline_mode = #tpu.pipeline_mode<synchronous>, transform_indices = @transform_14, window_bounds = array<i64: 32, 32>}, {pipeline_mode = #tpu.pipeline_mode<synchronous>, transform_indices = @transform_15, window_bounds = array<i64: 1, 32>}, {pipeline_mode = #tpu.pipeline_mode<synchronous>, transform_indices = @transform_16, window_bounds = array<i64: 32, 1>}, {pipeline_mode = #tpu.pipeline_mode<synchronous>, transform_indices = @transform_17, window_bounds = array<i64: 1, 1>}, {transform_indices = @transform_18, window_bounds = array<i64: 2, 2>}, {transform_indices = @transform_19, window_bounds = array<i64: 2, 2>}]} {
    %c0 = arith.constant 0 : index
    %c0_0 = arith.constant 0 : index
    %0 = vector.load %arg1[%c0, %c0_0] : memref<2x10xf32, #tpu.memory_space<vmem>>, vector<2x10xf32>
    %c0_1 = arith.constant 0 : index
    %c0_2 = arith.constant 0 : index
    %1 = vector.load %arg2[%c0_1, %c0_2] : memref<2x4xf32, #tpu.memory_space<vmem>>, vector<2x4xf32>
    %c0_3 = arith.constant 0 : index
    %c0_4 = arith.constant 0 : index
    %2 = vector.load %arg3[%c0_3, %c0_4] : memref<2x10xf32, #tpu.memory_space<vmem>>, vector<2x10xf32>
    %3 = arith.truncf %0 : vector<2x10xf32> to vector<2x10xbf16>
    %c0_5 = arith.constant 0 : index
    %c0_6 = arith.constant 0 : index
    %4 = vector.load %arg4[%c0_5, %c0_6] : memref<10x32xbf16, #tpu.memory_space<vmem>>, vector<10x32xbf16>
    %cst = arith.constant dense<0.000000e+00> : vector<2x32xf32>
    %5 = tpu.matmul %3, %4, %cst {dimension_numbers = #tpu.dot_dimension_numbers<[1], [0], [0], [1], [0, 0, 1, 1], [], []>} : vector<2x10xbf16>, vector<10x32xbf16>, vector<2x32xf32> -> vector<2x32xf32>
    %6 = arith.truncf %1 : vector<2x4xf32> to vector<2x4xbf16>
    %c0_7 = arith.constant 0 : index
    %c0_8 = arith.constant 0 : index
    %7 = vector.load %arg5[%c0_7, %c0_8] : memref<4x32xbf16, #tpu.memory_space<vmem>>, vector<4x32xbf16>
    %cst_9 = arith.constant dense<0.000000e+00> : vector<2x32xf32>
    %8 = tpu.matmul %6, %7, %cst_9 {dimension_numbers = #tpu.dot_dimension_numbers<[1], [0], [0], [1], [0, 0, 1, 1], [], []>} : vector<2x4xbf16>, vector<4x32xbf16>, vector<2x32xf32> -> vector<2x32xf32>
    %9 = arith.addf %5, %8 : vector<2x32xf32>
    %10 = arith.truncf %2 : vector<2x10xf32> to vector<2x10xbf16>
    %c0_10 = arith.constant 0 : index
    %c0_11 = arith.constant 0 : index
    %11 = vector.load %arg6[%c0_10, %c0_11] : memref<10x32xbf16, #tpu.memory_space<vmem>>, vector<10x32xbf16>
    %cst_12 = arith.constant dense<0.000000e+00> : vector<2x32xf32>
    %12 = tpu.matmul %10, %11, %cst_12 {dimension_numbers = #tpu.dot_dimension_numbers<[1], [0], [0], [1], [0, 0, 1, 1], [], []>} : vector<2x10xbf16>, vector<10x32xbf16>, vector<2x32xf32> -> vector<2x32xf32>
    %13 = arith.addf %9, %12 : vector<2x32xf32>
    %c0_13 = arith.constant 0 : index
    %c0_14 = arith.constant 0 : index
    %14 = vector.load %arg7[%c0_13, %c0_14] : memref<1x32xf32, #tpu.memory_space<vmem>>, vector<1x32xf32>
    %15 = vector.broadcast %14 : vector<1x32xf32> to vector<2x32xf32>
    %16 = arith.addf %13, %15 : vector<2x32xf32>
    %cst_15 = arith.constant 0.000000e+00 : f32
    %17 = vector.broadcast %cst_15 : f32 to vector<2x32xf32>
    %18 = arith.maximumf %16, %17 : vector<2x32xf32>
    %19 = arith.truncf %18 : vector<2x32xf32> to vector<2x32xbf16>
    %c0_16 = arith.constant 0 : index
    %c0_17 = arith.constant 0 : index
    %20 = vector.load %arg8[%c0_16, %c0_17] : memref<32x32xbf16, #tpu.memory_space<vmem>>, vector<32x32xbf16>
    %cst_18 = arith.constant dense<0.000000e+00> : vector<2x32xf32>
    %21 = tpu.matmul %19, %20, %cst_18 {dimension_numbers = #tpu.dot_dimension_numbers<[1], [0], [0], [1], [0, 0, 1, 1], [], []>} : vector<2x32xbf16>, vector<32x32xbf16>, vector<2x32xf32> -> vector<2x32xf32>
    %c0_19 = arith.constant 0 : index
    %c0_20 = arith.constant 0 : index
    %22 = vector.load %arg9[%c0_19, %c0_20] : memref<1x32xf32, #tpu.memory_space<vmem>>, vector<1x32xf32>
    %23 = vector.broadcast %22 : vector<1x32xf32> to vector<2x32xf32>
    %24 = arith.addf %21, %23 : vector<2x32xf32>
    %cst_21 = arith.constant 0.000000e+00 : f32
    %25 = vector.broadcast %cst_21 : f32 to vector<2x32xf32>
    %26 = arith.maximumf %24, %25 : vector<2x32xf32>
    %27 = arith.truncf %26 : vector<2x32xf32> to vector<2x32xbf16>
    %c0_22 = arith.constant 0 : index
    %c0_23 = arith.constant 0 : index
    %28 = vector.load %arg10[%c0_22, %c0_23] : memref<32x1xbf16, #tpu.memory_space<vmem>>, vector<32x1xbf16>
    %cst_24 = arith.constant dense<0.000000e+00> : vector<2x1xf32>
    %29 = tpu.matmul %27, %28, %cst_24 {dimension_numbers = #tpu.dot_dimension_numbers<[1], [0], [0], [1], [0, 0, 1, 1], [], []>} : vector<2x32xbf16>, vector<32x1xbf16>, vector<2x1xf32> -> vector<2x1xf32>
    %c0_25 = arith.constant 0 : index
    %c0_26 = arith.constant 0 : index
    %30 = vector.load %arg11[%c0_25, %c0_26] : memref<1x1xf32, #tpu.memory_space<vmem>>, vector<1x1xf32>
    %31 = vector.broadcast %30 : vector<1x1xf32> to vector<2x1xf32>
    %32 = arith.addf %29, %31 : vector<2x1xf32>
    %cst_27 = arith.constant 0.000000e+00 : f32
    %33 = vector.broadcast %cst_27 : f32 to vector<2x1xf32>
    %34 = arith.subf %33, %32 : vector<2x1xf32>
    %35 = math.exp %34 : vector<2x1xf32>
    %cst_28 = arith.constant 1.000000e+00 : f32
    %36 = vector.broadcast %cst_28 : f32 to vector<2x1xf32>
    %37 = arith.addf %36, %35 : vector<2x1xf32>
    %cst_29 = arith.constant 1.000000e+00 : f32
    %38 = vector.broadcast %cst_29 : f32 to vector<2x1xf32>
    %39 = arith.divf %38, %37 : vector<2x1xf32>
    %cst_30 = arith.constant 1.000000e+00 : f32
    %40 = vector.broadcast %cst_30 : f32 to vector<2x1xf32>
    %41 = arith.subf %40, %39 : vector<2x1xf32>
    %42 = tpu.concatenate %41, %39 in 1 : vector<2x1xf32>, vector<2x1xf32> -> vector<2x2xf32>
    %c0_31 = arith.constant 0 : index
    %c0_32 = arith.constant 0 : index
    %43 = vector.load %arg19[%c0_31, %c0_32] : memref<2x2xf32, #tpu.memory_space<vmem>>, vector<2x2xf32>
    tpu.vector_store %arg19[%c0_31, %c0_32], %42 {strides = array<i32>} : memref<2x2xf32, #tpu.memory_space<vmem>>, vector<2x2xf32>,
    %44 = arith.truncf %0 : vector<2x10xf32> to vector<2x10xbf16>
    %c0_33 = arith.constant 0 : index
    %c0_34 = arith.constant 0 : index
    %45 = vector.load %arg12[%c0_33, %c0_34] : memref<10x32xbf16, #tpu.memory_space<vmem>>, vector<10x32xbf16>
    %cst_35 = arith.constant dense<0.000000e+00> : vector<2x32xf32>
    %46 = tpu.matmul %44, %45, %cst_35 {dimension_numbers = #tpu.dot_dimension_numbers<[1], [0], [0], [1], [0, 0, 1, 1], [], []>} : vector<2x10xbf16>, vector<10x32xbf16>, vector<2x32xf32> -> vector<2x32xf32>
    %47 = arith.truncf %1 : vector<2x4xf32> to vector<2x4xbf16>
    %c0_36 = arith.constant 0 : index
    %c0_37 = arith.constant 0 : index
    %48 = vector.load %arg13[%c0_36, %c0_37] : memref<4x32xbf16, #tpu.memory_space<vmem>>, vector<4x32xbf16>
    %cst_38 = arith.constant dense<0.000000e+00> : vector<2x32xf32>
    %49 = tpu.matmul %47, %48, %cst_38 {dimension_numbers = #tpu.dot_dimension_numbers<[1], [0], [0], [1], [0, 0, 1, 1], [], []>} : vector<2x4xbf16>, vector<4x32xbf16>, vector<2x32xf32> -> vector<2x32xf32>
    %50 = arith.addf %46, %49 : vector<2x32xf32>
    %c0_39 = arith.constant 0 : index
    %c0_40 = arith.constant 0 : index
    %51 = vector.load %arg14[%c0_39, %c0_40] : memref<1x32xf32, #tpu.memory_space<vmem>>, vector<1x32xf32>
    %52 = vector.broadcast %51 : vector<1x32xf32> to vector<2x32xf32>
    %53 = arith.addf %50, %52 : vector<2x32xf32>
    %cst_41 = arith.constant 0.000000e+00 : f32
    %54 = vector.broadcast %cst_41 : f32 to vector<2x32xf32>
    %55 = arith.maximumf %53, %54 : vector<2x32xf32>
    %56 = arith.truncf %55 : vector<2x32xf32> to vector<2x32xbf16>
    %c0_42 = arith.constant 0 : index
    %c0_43 = arith.constant 0 : index
    %57 = vector.load %arg15[%c0_42, %c0_43] : memref<32x32xbf16, #tpu.memory_space<vmem>>, vector<32x32xbf16>
    %cst_44 = arith.constant dense<0.000000e+00> : vector<2x32xf32>
    %58 = tpu.matmul %56, %57, %cst_44 {dimension_numbers = #tpu.dot_dimension_numbers<[1], [0], [0], [1], [0, 0, 1, 1], [], []>} : vector<2x32xbf16>, vector<32x32xbf16>, vector<2x32xf32> -> vector<2x32xf32>
    %c0_45 = arith.constant 0 : index
    %c0_46 = arith.constant 0 : index
    %59 = vector.load %arg16[%c0_45, %c0_46] : memref<1x32xf32, #tpu.memory_space<vmem>>, vector<1x32xf32>
    %60 = vector.broadcast %59 : vector<1x32xf32> to vector<2x32xf32>
    %61 = arith.addf %58, %60 : vector<2x32xf32>
    %cst_47 = arith.constant 0.000000e+00 : f32
    %62 = vector.broadcast %cst_47 : f32 to vector<2x32xf32>
    %63 = arith.maximumf %61, %62 : vector<2x32xf32>
    %64 = arith.truncf %63 : vector<2x32xf32> to vector<2x32xbf16>
    %c0_48 = arith.constant 0 : index
    %c0_49 = arith.constant 0 : index
    %65 = vector.load %arg17[%c0_48, %c0_49] : memref<32x1xbf16, #tpu.memory_space<vmem>>, vector<32x1xbf16>
    %cst_50 = arith.constant dense<0.000000e+00> : vector<2x1xf32>
    %66 = tpu.matmul %64, %65, %cst_50 {dimension_numbers = #tpu.dot_dimension_numbers<[1], [0], [0], [1], [0, 0, 1, 1], [], []>} : vector<2x32xbf16>, vector<32x1xbf16>, vector<2x1xf32> -> vector<2x1xf32>
    %c0_51 = arith.constant 0 : index
    %c0_52 = arith.constant 0 : index
    %67 = vector.load %arg18[%c0_51, %c0_52] : memref<1x1xf32, #tpu.memory_space<vmem>>, vector<1x1xf32>
    %68 = vector.broadcast %67 : vector<1x1xf32> to vector<2x1xf32>
    %69 = arith.addf %66, %68 : vector<2x1xf32>
    %cst_53 = arith.constant 0.000000e+00 : f32
    %70 = vector.broadcast %cst_53 : f32 to vector<2x1xf32>
    %71 = arith.subf %70, %69 : vector<2x1xf32>
    %72 = math.exp %71 : vector<2x1xf32>
    %cst_54 = arith.constant 1.000000e+00 : f32
    %73 = vector.broadcast %cst_54 : f32 to vector<2x1xf32>
    %74 = arith.addf %73, %72 : vector<2x1xf32>
    %cst_55 = arith.constant 1.000000e+00 : f32
    %75 = vector.broadcast %cst_55 : f32 to vector<2x1xf32>
    %76 = arith.divf %75, %74 : vector<2x1xf32>
    %cst_56 = arith.constant 1.000000e+00 : f32
    %77 = vector.broadcast %cst_56 : f32 to vector<2x1xf32>
    %78 = arith.subf %77, %76 : vector<2x1xf32>
    %79 = tpu.concatenate %78, %76 in 1 : vector<2x1xf32>, vector<2x1xf32> -> vector<2x2xf32>
    %c0_57 = arith.constant 0 : index
    %c0_58 = arith.constant 0 : index
    %80 = vector.load %arg20[%c0_57, %c0_58] : memref<2x2xf32, #tpu.memory_space<vmem>>, vector<2x2xf32>
    tpu.vector_store %arg20[%c0_57, %c0_58], %79 {strides = array<i32>} : memref<2x2xf32, #tpu.memory_space<vmem>>, vector<2x2xf32>,
    return
  }
  func.func @transform_0(%arg0: i32) -> (i32, i32) {
    %c0_i32 = arith.constant 0 : i32
    %c0_i32_0 = arith.constant 0 : i32
    return %arg0, %c0_i32 : i32, i32
  }
  func.func @transform_1(%arg0: i32) -> (i32, i32) {
    %c0_i32 = arith.constant 0 : i32
    %c0_i32_0 = arith.constant 0 : i32
    return %arg0, %c0_i32 : i32, i32
  }
  func.func @transform_2(%arg0: i32) -> (i32, i32) {
    %c0_i32 = arith.constant 0 : i32
    %c0_i32_0 = arith.constant 0 : i32
    return %arg0, %c0_i32 : i32, i32
  }
  func.func @transform_3(%arg0: i32) -> (i32, i32) {
    %c0_i32 = arith.constant 0 : i32
    %c0_i32_0 = arith.constant 0 : i32
    %c0_i32_1 = arith.constant 0 : i32
    return %c0_i32, %c0_i32_0 : i32, i32
  }
  func.func @transform_4(%arg0: i32) -> (i32, i32) {
    %c0_i32 = arith.constant 0 : i32
    %c0_i32_0 = arith.constant 0 : i32
    %c0_i32_1 = arith.constant 0 : i32
    return %c0_i32, %c0_i32_0 : i32, i32
  }
  func.func @transform_5(%arg0: i32) -> (i32, i32) {
    %c0_i32 = arith.constant 0 : i32
    %c0_i32_0 = arith.constant 0 : i32
    %c0_i32_1 = arith.constant 0 : i32
    return %c0_i32, %c0_i32_0 : i32, i32
  }
  func.func @transform_6(%arg0: i32) -> (i32, i32) {
    %c0_i32 = arith.constant 0 : i32
    %c0_i32_0 = arith.constant 0 : i32
    %c0_i32_1 = arith.constant 0 : i32
    return %c0_i32, %c0_i32_0 : i32, i32
  }
  func.func @transform_7(%arg0: i32) -> (i32, i32) {
    %c0_i32 = arith.constant 0 : i32
    %c0_i32_0 = arith.constant 0 : i32
    %c0_i32_1 = arith.constant 0 : i32
    return %c0_i32, %c0_i32_0 : i32, i32
  }
  func.func @transform_8(%arg0: i32) -> (i32, i32) {
    %c0_i32 = arith.constant 0 : i32
    %c0_i32_0 = arith.constant 0 : i32
    %c0_i32_1 = arith.constant 0 : i32
    return %c0_i32, %c0_i32_0 : i32, i32
  }
  func.func @transform_9(%arg0: i32) -> (i32, i32) {
    %c0_i32 = arith.constant 0 : i32
    %c0_i32_0 = arith.constant 0 : i32
    %c0_i32_1 = arith.constant 0 : i32
    return %c0_i32, %c0_i32_0 : i32, i32
  }
  func.func @transform_10(%arg0: i32) -> (i32, i32) {
    %c0_i32 = arith.constant 0 : i32
    %c0_i32_0 = arith.constant 0 : i32
    %c0_i32_1 = arith.constant 0 : i32
    return %c0_i32, %c0_i32_0 : i32, i32
  }
  func.func @transform_11(%arg0: i32) -> (i32, i32) {
    %c0_i32 = arith.constant 0 : i32
    %c0_i32_0 = arith.constant 0 : i32
    %c0_i32_1 = arith.constant 0 : i32
    return %c0_i32, %c0_i32_0 : i32, i32
  }
  func.func @transform_12(%arg0: i32) -> (i32, i32) {
    %c0_i32 = arith.constant 0 : i32
    %c0_i32_0 = arith.constant 0 : i32
    %c0_i32_1 = arith.constant 0 : i32
    return %c0_i32, %c0_i32_0 : i32, i32
  }
  func.func @transform_13(%arg0: i32) -> (i32, i32) {
    %c0_i32 = arith.constant 0 : i32
    %c0_i32_0 = arith.constant 0 : i32
    %c0_i32_1 = arith.constant 0 : i32
    return %c0_i32, %c0_i32_0 : i32, i32
  }
  func.func @transform_14(%arg0: i32) -> (i32, i32) {
    %c0_i32 = arith.constant 0 : i32
    %c0_i32_0 = arith.constant 0 : i32
    %c0_i32_1 = arith.constant 0 : i32
    return %c0_i32, %c0_i32_0 : i32, i32
  }
  func.func @transform_15(%arg0: i32) -> (i32, i32) {
    %c0_i32 = arith.constant 0 : i32
    %c0_i32_0 = arith.constant 0 : i32
    %c0_i32_1 = arith.constant 0 : i32
    return %c0_i32, %c0_i32_0 : i32, i32
  }
  func.func @transform_16(%arg0: i32) -> (i32, i32) {
    %c0_i32 = arith.constant 0 : i32
    %c0_i32_0 = arith.constant 0 : i32
    %c0_i32_1 = arith.constant 0 : i32
    return %c0_i32, %c0_i32_0 : i32, i32
  }
  func.func @transform_17(%arg0: i32) -> (i32, i32) {
    %c0_i32 = arith.constant 0 : i32
    %c0_i32_0 = arith.constant 0 : i32
    %c0_i32_1 = arith.constant 0 : i32
    return %c0_i32, %c0_i32_0 : i32, i32
  }
  func.func @transform_18(%arg0: i32) -> (i32, i32) {
    %c0_i32 = arith.constant 0 : i32
    %c0_i32_0 = arith.constant 0 : i32
    return %arg0, %c0_i32 : i32, i32
  }
  func.func @transform_19(%arg0: i32) -> (i32, i32) {
    %c0_i32 = arith.constant 0 : i32
    %c0_i32_0 = arith.constant 0 : i32
    return %arg0, %c0_i32 : i32, i32
  }
}

</mosaic_0001>

<llo_original>
// kernel: tpu_custom_call.1
$region0: #{tpu_custom_call.1}
  #allocation0 [shape = 'u32[]', space=smem, size = 0x4, offset = 0x4, fixed_abs, tag = 'smem constant byte address 0x4 - core index']
  #allocation1 [shape = 'u32[144,128]{1,0:T(1,128)}', space=vmem, size = 0x12000, scoped, tag = 'internal scratch']
  #allocation2 [shape = 'f32[1,1]{1,0:T(1,128)S(1)}', space=vmem, size = 0x200, scoped, tag = 'scoped memory for tpu_custom_call.1']
  #allocation3 [shape = 'f32[1,1]{1,0:T(1,128)S(1)}', space=vmem, size = 0x200, scoped, tag = 'scoped memory for tpu_custom_call.1']
  %s0 = inlined_call_operand.hbm [shape: f32[2,10], index: 0, kind: input, shape index: {}]
  %s1 = inlined_call_operand.hbm [shape: f32[2,4], index: 1, kind: input, shape index: {}]
  %s2 = inlined_call_operand.hbm [shape: f32[2,10], index: 2, kind: input, shape index: {}]
  %s3 = inlined_call_operand.vmem [shape: bf16[10,32], index: 3, kind: input, shape index: {}]
  %s4 = inlined_call_operand.hbm [shape: bf16[4,32], index: 4, kind: input, shape index: {}]
  %s5 = inlined_call_operand.vmem [shape: bf16[10,32], index: 5, kind: input, shape index: {}]
  %s6 = inlined_call_operand.vmem [shape: f32[1,32], index: 6, kind: input, shape index: {}]
  %s7 = inlined_call_operand.vmem [shape: bf16[32,32], index: 7, kind: input, shape index: {}]
  %s8 = inlined_call_operand.vmem [shape: f32[1,32], index: 8, kind: input, shape index: {}]
  %s9 = inlined_call_operand.vmem [shape: bf16[32,1], index: 9, kind: input, shape index: {}]
  %s10 = inlined_call_operand.<no memory space> [shape: f32[1,1], index: 10, kind: input, shape index: {}]
  %s11 = inlined_call_operand.vmem [shape: bf16[10,32], index: 11, kind: input, shape index: {}]
  %s12 = inlined_call_operand.vmem [shape: bf16[4,32], index: 12, kind: input, shape index: {}]
  %s13 = inlined_call_operand.vmem [shape: f32[1,32], index: 13, kind: input, shape index: {}]
  %s14 = inlined_call_operand.vmem [shape: bf16[32,32], index: 14, kind: input, shape index: {}]
  %s15 = inlined_call_operand.vmem [shape: f32[1,32], index: 15, kind: input, shape index: {}]
  %s16 = inlined_call_operand.vmem [shape: bf16[32,1], index: 16, kind: input, shape index: {}]
  %s17 = inlined_call_operand.<no memory space> [shape: f32[1,1], index: 17, kind: input, shape index: {}]
  %s18 = inlined_call_operand.hbm [shape: f32[2,2], index: 18, kind: output, shape index: {0}]
  %s19 = inlined_call_operand.hbm [shape: f32[2,2], index: 19, kind: output, shape index: {1}]
  %20 = xla_tuple %s18, %s19
  %s21 = sld [smem:[#allocation0]]
  $region106: #{tpu_custom_call.1} parent=0
    _
  %s23 = ssub.s32 1, %s21
  %s24 = scalar_select 0, %s23, %s21
  %v25 = vstv %s10
  %26 = vst [vmem:[#allocation2] sm:$0x1] %v25
  %v27 = vstv %s17
  %28 = vst [vmem:[#allocation3] sm:$0x1] %v27
  $region1: #{tpu_custom_call.1} parent=0
    #allocation4 [shape = 'u8[1024]{0}', space=vmem, size = 0x400, scoped, tag = 'input window, operand 0, single buffered']
    #allocation5 [shape = 's32[1]{0}', space=sflag, size = 0x4, scoped, tag = 'scoped memory for tpu_custom_call.1']
    #allocation6 [shape = 's32[1]{0}', space=sflag, size = 0x4, scoped, tag = 'scoped memory for tpu_custom_call.1']
    #allocation7 [shape = 'u8[1024]{0}', space=vmem, size = 0x400, scoped, tag = 'input window, operand 1, single buffered']
    #allocation8 [shape = 's32[1]{0}', space=sflag, size = 0x4, scoped, tag = 'scoped memory for tpu_custom_call.1']
    #allocation9 [shape = 'u8[1024]{0}', space=vmem, size = 0x400, scoped, tag = 'input window, operand 2, single buffered']
    #allocation10 [shape = 'u8[1024]{0}', space=vmem, size = 0x400, scoped, tag = 'input window, operand 4, single buffered']
    #allocation11 [shape = 's32[1]{0}', space=sflag, size = 0x4, scoped, tag = 'scoped memory for tpu_custom_call.1']
    #allocation12 [shape = 'u8[1024]{0}', space=vmem, size = 0x400, scoped, tag = 'output window, operand 0, single buffered']
    #allocation13 [shape = 'u8[1024]{0}', space=vmem, size = 0x400, scoped, tag = 'output window, operand 1, single buffered']
    #allocation14 [shape = 's32[1]{0}', space=sflag, size = 0x4, scoped, tag = 'scoped memory for tpu_custom_call.1']
    %29 = vsyncpa [#allocation5], 0
    %30 = vsyncpa [#allocation8], 0
    %31 = vsyncpa [#allocation11], 0
    %32 = vsyncpa [#allocation6], 0
    %33 = vsyncpa [#allocation14], 0
    // Predicated region
    $region2: #{tpu_custom_call.1} parent=1 // pred_check
      _
    $region3: #{tpu_custom_call.1} parent=1 // pred_check_branch
      %35 = sbr.rel (0) target = $region5
    $region4: #{tpu_custom_call.1} parent=1 // pred_region
      %s37 = ssub.s32 32, 32
      %38 = vsyncadd [#allocation5], %s37
      %s40 = sshll.u32 [#allocation4], 4
      %s41 = int_to_ptr.vmem [resolvable:$true] %s40
      %43 = dma.hbm_to_vmem [thread:$0]  %s0, 32, %s41, [#allocation5]
    $region5: #{tpu_custom_call.1} parent=1 // pred_fallthru
      _
    // Predicated region
    $region6: #{tpu_custom_call.1} parent=1 // pred_check
      _
    $region7: #{tpu_custom_call.1} parent=1 // pred_check_branch
      %45 = sbr.rel (0) target = $region9
    $region8: #{tpu_custom_call.1} parent=1 // pred_region
      %s47 = ssub.s32 32, 32
      %48 = vsyncadd [#allocation8], %s47
      %s50 = sshll.u32 [#allocation7], 4
      %s51 = int_to_ptr.vmem [resolvable:$true] %s50
      %53 = dma.hbm_to_vmem [thread:$0]  %s1, 32, %s51, [#allocation8]
    $region9: #{tpu_custom_call.1} parent=1 // pred_fallthru
      _
    // Predicated region
    $region10: #{tpu_custom_call.1} parent=1 // pred_check
      _
    $region11: #{tpu_custom_call.1} parent=1 // pred_check_branch
      %55 = sbr.rel (0) target = $region13
    $region12: #{tpu_custom_call.1} parent=1 // pred_region
      %s57 = ssub.s32 32, 32
      %58 = vsyncadd [#allocation8], %s57
      %s60 = sshll.u32 [#allocation9], 4
      %s61 = int_to_ptr.vmem [resolvable:$true] %s60
      %63 = dma.hbm_to_vmem [thread:$0]  %s2, 32, %s61, [#allocation8]
    $region13: #{tpu_custom_call.1} parent=1 // pred_fallthru
      _
    // Predicated region
    $region14: #{tpu_custom_call.1} parent=1 // pred_check
      _
    $region15: #{tpu_custom_call.1} parent=1 // pred_check_branch
      %65 = sbr.rel (0) target = $region17
    $region16: #{tpu_custom_call.1} parent=1 // pred_region
      _
    $region17: #{tpu_custom_call.1} parent=1 // pred_fallthru
      _
    // Predicated region
    $region18: #{tpu_custom_call.1} parent=1 // pred_check
      _
    $region19: #{tpu_custom_call.1} parent=1 // pred_check_branch
      %67 = sbr.rel (0) target = $region21
    $region20: #{tpu_custom_call.1} parent=1 // pred_region
      %s69 = ssub.s32 32, 32
      %70 = vsyncadd [#allocation11], %s69
      %s72 = sshll.u32 [#allocation10], 4
      %s73 = int_to_ptr.vmem [resolvable:$true] %s72
      %75 = dma.hbm_to_vmem [thread:$0]  %s4, 32, %s73, [#allocation11]
    $region21: #{tpu_custom_call.1} parent=1 // pred_fallthru
      _
    // Predicated region
    $region22: #{tpu_custom_call.1} parent=1 // pred_check
      _
    $region23: #{tpu_custom_call.1} parent=1 // pred_check_branch
      %77 = sbr.rel (0) target = $region25
    $region24: #{tpu_custom_call.1} parent=1 // pred_region
      _
    $region25: #{tpu_custom_call.1} parent=1 // pred_fallthru
      _
    // Predicated region
    $region26: #{tpu_custom_call.1} parent=1 // pred_check
      _
    $region27: #{tpu_custom_call.1} parent=1 // pred_check_branch
      %79 = sbr.rel (0) target = $region29
    $region28: #{tpu_custom_call.1} parent=1 // pred_region
      _
    $region29: #{tpu_custom_call.1} parent=1 // pred_fallthru
      _
    // Predicated region
    $region30: #{tpu_custom_call.1} parent=1 // pred_check
      _
    $region31: #{tpu_custom_call.1} parent=1 // pred_check_branch
      %81 = sbr.rel (0) target = $region33
    $region32: #{tpu_custom_call.1} parent=1 // pred_region
      _
    $region33: #{tpu_custom_call.1} parent=1 // pred_fallthru
      _
    // Predicated region
    $region34: #{tpu_custom_call.1} parent=1 // pred_check
      _
    $region35: #{tpu_custom_call.1} parent=1 // pred_check_branch
      %83 = sbr.rel (0) target = $region37
    $region36: #{tpu_custom_call.1} parent=1 // pred_region
      _
    $region37: #{tpu_custom_call.1} parent=1 // pred_fallthru
      _
    // Predicated region
    $region38: #{tpu_custom_call.1} parent=1 // pred_check
      _
    $region39: #{tpu_custom_call.1} parent=1 // pred_check_branch
      %85 = sbr.rel (0) target = $region41
    $region40: #{tpu_custom_call.1} parent=1 // pred_region
      _
    $region41: #{tpu_custom_call.1} parent=1 // pred_fallthru
      _
    // Predicated region
    $region42: #{tpu_custom_call.1} parent=1 // pred_check
      _
    $region43: #{tpu_custom_call.1} parent=1 // pred_check_branch
      %87 = sbr.rel (0) target = $region45
    $region44: #{tpu_custom_call.1} parent=1 // pred_region
      _
    $region45: #{tpu_custom_call.1} parent=1 // pred_fallthru
      _
    // Predicated region
    $region46: #{tpu_custom_call.1} parent=1 // pred_check
      _
    $region47: #{tpu_custom_call.1} parent=1 // pred_check_branch
      %89 = sbr.rel (0) target = $region49
    $region48: #{tpu_custom_call.1} parent=1 // pred_region
      _
    $region49: #{tpu_custom_call.1} parent=1 // pred_fallthru
      _
    // Predicated region
    $region50: #{tpu_custom_call.1} parent=1 // pred_check
      _
    $region51: #{tpu_custom_call.1} parent=1 // pred_check_branch
      %91 = sbr.rel (0) target = $region53
    $region52: #{tpu_custom_call.1} parent=1 // pred_region
      _
    $region53: #{tpu_custom_call.1} parent=1 // pred_fallthru
      _
    // Predicated region
    $region54: #{tpu_custom_call.1} parent=1 // pred_check
      _
    $region55: #{tpu_custom_call.1} parent=1 // pred_check_branch
      %93 = sbr.rel (0) target = $region57
    $region56: #{tpu_custom_call.1} parent=1 // pred_region
      _
    $region57: #{tpu_custom_call.1} parent=1 // pred_fallthru
      _
    // Predicated region
    $region58: #{tpu_custom_call.1} parent=1 // pred_check
      _
    $region59: #{tpu_custom_call.1} parent=1 // pred_check_branch
      %95 = sbr.rel (0) target = $region61
    $region60: #{tpu_custom_call.1} parent=1 // pred_region
      _
    $region61: #{tpu_custom_call.1} parent=1 // pred_fallthru
      _
    // Predicated region
    $region62: #{tpu_custom_call.1} parent=1 // pred_check
      _
    $region63: #{tpu_custom_call.1} parent=1 // pred_check_branch
      %97 = sbr.rel (0) target = $region65
    $region64: #{tpu_custom_call.1} parent=1 // pred_region
      _
    $region65: #{tpu_custom_call.1} parent=1 // pred_fallthru
      _
    // Predicated region
    $region66: #{tpu_custom_call.1} parent=1 // pred_check
      _
    $region67: #{tpu_custom_call.1} parent=1 // pred_check_branch
      %99 = sbr.rel (0) target = $region69
    $region68: #{tpu_custom_call.1} parent=1 // pred_region
      _
    $region69: #{tpu_custom_call.1} parent=1 // pred_fallthru
      _
    // Predicated region
    $region70: #{tpu_custom_call.1} parent=1 // pred_check
      _
    $region71: #{tpu_custom_call.1} parent=1 // pred_check_branch
      %101 = sbr.rel (0) target = $region73
    $region72: #{tpu_custom_call.1} parent=1 // pred_region
      _
    $region73: #{tpu_custom_call.1} parent=1 // pred_fallthru
      _
    // Predicated region
    $region74: #{tpu_custom_call.1} parent=1 // pred_check
      _
    $region75: #{tpu_custom_call.1} parent=1 // pred_check_branch
      %103 = sbr.rel (0) target = $region77
    $region76: #{tpu_custom_call.1} parent=1 // pred_region
      %104 = dma.done [#allocation5], 32
    $region77: #{tpu_custom_call.1} parent=1 // pred_fallthru
      _
    // Predicated region
    $region78: #{tpu_custom_call.1} parent=1 // pred_check
      _
    $region79: #{tpu_custom_call.1} parent=1 // pred_check_branch
      %106 = sbr.rel (0) target = $region81
    $region80: #{tpu_custom_call.1} parent=1 // pred_region
      %107 = dma.done [#allocation8], 32
    $region81: #{tpu_custom_call.1} parent=1 // pred_fallthru
      _
    // Predicated region
    $region82: #{tpu_custom_call.1} parent=1 // pred_check
      _
    $region83: #{tpu_custom_call.1} parent=1 // pred_check_branch
      %109 = sbr.rel (0) target = $region85
    $region84: #{tpu_custom_call.1} parent=1 // pred_region
      %110 = dma.done [#allocation8], 32
    $region85: #{tpu_custom_call.1} parent=1 // pred_fallthru
      _
    // Predicated region
    $region86: #{tpu_custom_call.1} parent=1 // pred_check
      _
    $region87: #{tpu_custom_call.1} parent=1 // pred_check_branch
      %112 = sbr.rel (0) target = $region89
    $region88: #{tpu_custom_call.1} parent=1 // pred_region
      %113 = dma.done [#allocation11], 32
    $region89: #{tpu_custom_call.1} parent=1 // pred_fallthru
      _
    %v115 = vld [vmem:[#allocation4] sm:$0x3]
    %v116 = vld [vmem:[#allocation7] sm:$0x3]
    %v117 = vld [vmem:[#allocation9] sm:$0x3]
    %v118 = vpack.c.bf16 %v115, %v115
    %v119 = vld [vmem:[%s3] sm:$0xf]
    %v120 = vld [vmem:[%s3 + $0x4] sm:$0x1]
    %v121 = vpack.c.bf16 %v116, %v116
    %v122 = vld [vmem:[#allocation10] sm:$0x3]
    %vm123 = vcmask 31744
    %v125 = vsel %vm123, %v121, 0
    %vm127 = vcmask 1041408
    %v129 = vsel %vm127, %v122, 0
    %131 = vmatprep.subr.bf16.mxu0 0
    %132 = vmatpush1.bf16.msra.mxu0 %v129
    %133 = vmatprep.subr.bf16.mxu0 0
    %134 = vmatpush1.bf16.msra.mxu0 0
    %135 = vmatprep.subr.bf16.mxu0 0
    %136 = vmatpush1.bf16.msra.mxu0 0
    %137 = vmatprep.subr.bf16.mxu0 0
    %138 = vmatpush1.bf16.msra.mxu0 0
    %139 = vmatprep.subr.bf16.mxu0 0
    %140 = vmatpush1.bf16.msra.mxu0 0
    %141 = vmatprep.subr.bf16.mxu0 0
    %142 = vmatpush1.bf16.msra.mxu0 0
    %143 = vmatprep.subr.bf16.mxu0 0
    %144 = vmatpush1.bf16.msra.mxu0 0
    %145 = vmatprep.subr.bf16.mxu0 0
    %146 = vmatpush1.bf16.msra.mxu0 0
    %147 = vmatprep.subr.bf16.mxu0 0
    %148 = vmatpush1.bf16.msra.mxu0 0
    %149 = vmatprep.subr.bf16.mxu0 0
    %150 = vmatpush1.bf16.msra.mxu0 0
    %151 = vmatprep.subr.bf16.mxu0 0
    %152 = vmatpush1.bf16.msra.mxu0 0
    %153 = vmatprep.subr.bf16.mxu0 0
    %154 = vmatpush1.bf16.msra.mxu0 0
    %155 = vmatprep.subr.bf16.mxu0 0
    %156 = vmatpush1.bf16.msra.mxu0 0
    %157 = vmatprep.subr.bf16.mxu0 0
    %158 = vmatpush1.bf16.msra.mxu0 0
    %159 = vmatprep.subr.bf16.mxu0 0
    %160 = vmatpush1.bf16.msra.mxu0 0
    %161 = vmatprep.subr.bf16.mxu0 0
    %162 = vmatpush1.bf16.msra.mxu0 0
    %163 = vmatprep.mubr.bf16.mxu0 0
    %164 = vmatmul.mubr.bf16.gmra.mrb[0].mxu0 %v125
    %v165 = vpop.f32.mrb[0].mxu0
    %v166 = vadd.f32 0.0, %v165
    %v167 = vpop.f32.mrb[0].mxu0
    %v168 = vpop.f32.mrb[0].mxu0
    %v169 = vpop.f32.mrb[0].mxu0
    %170 = vdwg.mxu0
    %v173 = vunpack.c.l.b16 %v119
    %v174 = vunpack.c.l.b16 %v120
    %v175 = vpack.c.b16 %v174, %v173
    %vm176 = vcmask 80896
    %v178 = vsel %vm176, %v118, 0
    %vm180 = vcmask 1044480
    %v182 = vsel %vm180, %v175, 0
    %184 = vmatprep.subr.bf16.mxu0 0
    %185 = vmatpush1.bf16.msra.mxu0 %v182
    %186 = vmatprep.subr.bf16.mxu0 0
    %187 = vmatpush1.bf16.msra.mxu0 0
    %188 = vmatprep.subr.bf16.mxu0 0
    %189 = vmatpush1.bf16.msra.mxu0 0
    %190 = vmatprep.subr.bf16.mxu0 0
    %191 = vmatpush1.bf16.msra.mxu0 0
    %192 = vmatprep.subr.bf16.mxu0 0
    %193 = vmatpush1.bf16.msra.mxu0 0
    %194 = vmatprep.subr.bf16.mxu0 0
    %195 = vmatpush1.bf16.msra.mxu0 0
    %196 = vmatprep.subr.bf16.mxu0 0
    %197 = vmatpush1.bf16.msra.mxu0 0
    %198 = vmatprep.subr.bf16.mxu0 0
    %199 = vmatpush1.bf16.msra.mxu0 0
    %200 = vmatprep.subr.bf16.mxu0 0
    %201 = vmatpush1.bf16.msra.mxu0 0
    %202 = vmatprep.subr.bf16.mxu0 0
    %203 = vmatpush1.bf16.msra.mxu0 0
    %204 = vmatprep.subr.bf16.mxu0 0
    %205 = vmatpush1.bf16.msra.mxu0 0
    %206 = vmatprep.subr.bf16.mxu0 0
    %207 = vmatpush1.bf16.msra.mxu0 0
    %208 = vmatprep.subr.bf16.mxu0 0
    %209 = vmatpush1.bf16.msra.mxu0 0
    %210 = vmatprep.subr.bf16.mxu0 0
    %211 = vmatpush1.bf16.msra.mxu0 0
    %212 = vmatprep.subr.bf16.mxu0 0
    %213 = vmatpush1.bf16.msra.mxu0 0
    %214 = vmatprep.subr.bf16.mxu0 0
    %215 = vmatpush1.bf16.msra.mxu0 0
    %216 = vmatprep.mubr.bf16.mxu0 0
    %217 = vmatmul.mubr.bf16.gmra.mrb[0].mxu0 %v178
    %v218 = vpop.f32.mrb[0].mxu0
    %v219 = vadd.f32 %v166, %v218
    %v220 = vpop.f32.mrb[0].mxu0
    %v221 = vpop.f32.mrb[0].mxu0
    %v222 = vpop.f32.mrb[0].mxu0
    %223 = vdwg.mxu0
    %v224 = vpack.c.bf16 %v117, %v117
    %v225 = vld [vmem:[%s5] sm:$0xf]
    %v226 = vld [vmem:[%s5 + $0x4] sm:$0x1]
    %v229 = vunpack.c.l.b16 %v225
    %v230 = vunpack.c.l.b16 %v226
    %v231 = vpack.c.b16 %v230, %v229
    %v233 = vsel %vm176, %v224, 0
    %v236 = vsel %vm180, %v231, 0
    %238 = vmatprep.subr.bf16.mxu0 0
    %239 = vmatpush1.bf16.msra.mxu0 %v236
    %240 = vmatprep.subr.bf16.mxu0 0
    %241 = vmatpush1.bf16.msra.mxu0 0
    %242 = vmatprep.subr.bf16.mxu0 0
    %243 = vmatpush1.bf16.msra.mxu0 0
    %244 = vmatprep.subr.bf16.mxu0 0
    %245 = vmatpush1.bf16.msra.mxu0 0
    %246 = vmatprep.subr.bf16.mxu0 0
    %247 = vmatpush1.bf16.msra.mxu0 0
    %248 = vmatprep.subr.bf16.mxu0 0
    %249 = vmatpush1.bf16.msra.mxu0 0
    %250 = vmatprep.subr.bf16.mxu0 0
    %251 = vmatpush1.bf16.msra.mxu0 0
    %252 = vmatprep.subr.bf16.mxu0 0
    %253 = vmatpush1.bf16.msra.mxu0 0
    %254 = vmatprep.subr.bf16.mxu0 0
    %255 = vmatpush1.bf16.msra.mxu0 0
    %256 = vmatprep.subr.bf16.mxu0 0
    %257 = vmatpush1.bf16.msra.mxu0 0
    %258 = vmatprep.subr.bf16.mxu0 0
    %259 = vmatpush1.bf16.msra.mxu0 0
    %260 = vmatprep.subr.bf16.mxu0 0
    %261 = vmatpush1.bf16.msra.mxu0 0
    %262 = vmatprep.subr.bf16.mxu0 0
    %263 = vmatpush1.bf16.msra.mxu0 0
    %264 = vmatprep.subr.bf16.mxu0 0
    %265 = vmatpush1.bf16.msra.mxu0 0
    %266 = vmatprep.subr.bf16.mxu0 0
    %267 = vmatpush1.bf16.msra.mxu0 0
    %268 = vmatprep.subr.bf16.mxu0 0
    %269 = vmatpush1.bf16.msra.mxu0 0
    %270 = vmatprep.mubr.bf16.mxu0 0
    %271 = vmatmul.mubr.bf16.gmra.mrb[0].mxu0 %v233
    %v272 = vpop.f32.mrb[0].mxu0
    %v273 = vadd.f32 0.0, %v272
    %v274 = vpop.f32.mrb[0].mxu0
    %v275 = vpop.f32.mrb[0].mxu0
    %v276 = vpop.f32.mrb[0].mxu0
    %277 = vdwg.mxu0
    %v278 = vadd.f32 %v219, %v273
    %v279 = vld [vmem:[%s6] sm:$0x1]
    %v281 = vlaneseq
    %v282 = vshrl.u32 %v281, 7
    %v283 = vsub.s32 0, %v282
    %v284 = vrot.slane %v279, %v283
    %v286 = vadd.f32 %v278, %v284
    %v287 = vmax.f32 %v286, 0.0
    %v288 = vpack.c.bf16 %v287, %v287
    %v289 = vld [vmem:[%s7] sm:$0xf]
    %v290 = vld [vmem:[%s7 + $0x4] sm:$0xf]
    %v291 = vld [vmem:[%s7 + $0x8] sm:$0xf]
    %v292 = vld [vmem:[%s7 + $0xc] sm:$0xf]
    %v293 = vld [vmem:[%s8] sm:$0x1]
    %v295 = vlaneseq
    %v296 = vshrl.u32 %v295, 7
    %v297 = vsub.s32 0, %v296
    %v298 = vrot.slane %v293, %v297
    %v304 = vunpack.c.l.b16 %v289
    %v305 = vunpack.c.l.b16 %v290
    %v306 = vunpack.c.l.b16 %v291
    %v307 = vunpack.c.l.b16 %v292
    %v308 = vpack.c.b16 %v305, %v304
    %v309 = vpack.c.b16 %v307, %v306
    %vm312 = vcmask 261120
    %v314 = vsel %vm312, %v288, 0
    %316 = vmatprep.subr.bf16.mxu0 0
    %317 = vmatpush1.bf16.msra.mxu0 %v308
    %318 = vmatprep.subr.bf16.mxu0 0
    %319 = vmatpush1.bf16.msra.mxu0 %v309
    %320 = vmatprep.subr.bf16.mxu0 0
    %321 = vmatpush1.bf16.msra.mxu0 0
    %322 = vmatprep.subr.bf16.mxu0 0
    %323 = vmatpush1.bf16.msra.mxu0 0
    %324 = vmatprep.subr.bf16.mxu0 0
    %325 = vmatpush1.bf16.msra.mxu0 0
    %326 = vmatprep.subr.bf16.mxu0 0
    %327 = vmatpush1.bf16.msra.mxu0 0
    %328 = vmatprep.subr.bf16.mxu0 0
    %329 = vmatpush1.bf16.msra.mxu0 0
    %330 = vmatprep.subr.bf16.mxu0 0
    %331 = vmatpush1.bf16.msra.mxu0 0
    %332 = vmatprep.subr.bf16.mxu0 0
    %333 = vmatpush1.bf16.msra.mxu0 0
    %334 = vmatprep.subr.bf16.mxu0 0
    %335 = vmatpush1.bf16.msra.mxu0 0
    %336 = vmatprep.subr.bf16.mxu0 0
    %337 = vmatpush1.bf16.msra.mxu0 0
    %338 = vmatprep.subr.bf16.mxu0 0
    %339 = vmatpush1.bf16.msra.mxu0 0
    %340 = vmatprep.subr.bf16.mxu0 0
    %341 = vmatpush1.bf16.msra.mxu0 0
    %342 = vmatprep.subr.bf16.mxu0 0
    %343 = vmatpush1.bf16.msra.mxu0 0
    %344 = vmatprep.subr.bf16.mxu0 0
    %345 = vmatpush1.bf16.msra.mxu0 0
    %346 = vmatprep.subr.bf16.mxu0 0
    %347 = vmatpush1.bf16.msra.mxu0 0
    %348 = vmatprep.mubr.bf16.mxu0 0
    %349 = vmatmul.mubr.bf16.gmra.mrb[0].mxu0 %v314
    %v350 = vpop.f32.mrb[0].mxu0
    %v351 = vadd.f32 %v298, %v350
    %v352 = vpop.f32.mrb[0].mxu0
    %v353 = vpop.f32.mrb[0].mxu0
    %v354 = vpop.f32.mrb[0].mxu0
    %355 = vdwg.mxu0
    %v356 = vmax.f32 %v351, 0.0
    %v357 = vpack.c.bf16 %v356, %v356
    %v358 = vld [vmem:[%s9] sm:$0xf]
    %v359 = vld [vmem:[%s9 + $0x4] sm:$0xf]
    %v360 = vld [vmem:[%s9 + $0x8] sm:$0xf]
    %v361 = vld [vmem:[%s9 + $0xc] sm:$0xf]
    %v362 = vld [vmem:[#allocation2] sm:$0x1]
    %v364 = vlaneseq
    %v365 = vshrl.u32 %v364, 7
    %v366 = vsub.s32 0, %v365
    %v367 = vrot.slane %v362, %v366
    %v373 = vunpack.c.l.b16 %v358
    %v374 = vunpack.c.l.b16 %v359
    %v375 = vunpack.c.l.b16 %v360
    %v376 = vunpack.c.l.b16 %v361
    %v377 = vpack.c.b16 %v374, %v373
    %v378 = vpack.c.b16 %v376, %v375
    %v382 = vsel %vm312, %v357, 0
    %384 = vmatprep.subr.bf16.mxu0 0
    %385 = vmatpush1.bf16.msra.mxu0 %v377
    %386 = vmatprep.subr.bf16.mxu0 0
    %387 = vmatpush1.bf16.msra.mxu0 %v378
    %388 = vmatprep.subr.bf16.mxu0 0
    %389 = vmatpush1.bf16.msra.mxu0 0
    %390 = vmatprep.subr.bf16.mxu0 0
    %391 = vmatpush1.bf16.msra.mxu0 0
    %392 = vmatprep.subr.bf16.mxu0 0
    %393 = vmatpush1.bf16.msra.mxu0 0
    %394 = vmatprep.subr.bf16.mxu0 0
    %395 = vmatpush1.bf16.msra.mxu0 0
    %396 = vmatprep.subr.bf16.mxu0 0
    %397 = vmatpush1.bf16.msra.mxu0 0
    %398 = vmatprep.subr.bf16.mxu0 0
    %399 = vmatpush1.bf16.msra.mxu0 0
    %400 = vmatprep.subr.bf16.mxu0 0
    %401 = vmatpush1.bf16.msra.mxu0 0
    %402 = vmatprep.subr.bf16.mxu0 0
    %403 = vmatpush1.bf16.msra.mxu0 0
    %404 = vmatprep.subr.bf16.mxu0 0
    %405 = vmatpush1.bf16.msra.mxu0 0
    %406 = vmatprep.subr.bf16.mxu0 0
    %407 = vmatpush1.bf16.msra.mxu0 0
    %408 = vmatprep.subr.bf16.mxu0 0
    %409 = vmatpush1.bf16.msra.mxu0 0
    %410 = vmatprep.subr.bf16.mxu0 0
    %411 = vmatpush1.bf16.msra.mxu0 0
    %412 = vmatprep.subr.bf16.mxu0 0
    %413 = vmatpush1.bf16.msra.mxu0 0
    %414 = vmatprep.subr.bf16.mxu0 0
    %415 = vmatpush1.bf16.msra.mxu0 0
    %416 = vmatprep.mubr.bf16.mxu0 0
    %417 = vmatmul.mubr.bf16.gmra.mrb[0].mxu0 %v382
    %v418 = vpop.f32.mrb[0].mxu0
    %v419 = vadd.f32 %v367, %v418
    %v420 = vpop.f32.mrb[0].mxu0
    %v421 = vpop.f32.mrb[0].mxu0
    %v422 = vpop.f32.mrb[0].mxu0
    %423 = vdwg.mxu0
    %v424 = vsub.f32 0.0, %v419
    %v425 = vmul.f32 %v424, 1.442695
    %v426 = vpow.pop %v425
    %v427 = vadd.f32 %v426, 1.0
    %v428 = vrcp.pop %v427
    %v429 = vmul.f32 1.0, %v428
    %v430 = vsub.f32 1.0, %v429
    %432 = vrot.lane.b32.xlu0 %v429, 1
    %v433 = vpop.permute.xlu0 %432
    %vm435 = vcmask 7168
    %v436 = vsel %vm435, %v430, %v433
    %vm437 = vcmask 9216
    %438 = vst.msk [vmem:[#allocation12] sm:$0x3] %vm437, %v436
    %v439 = vld [vmem:[%s11] sm:$0xf]
    %v440 = vld [vmem:[%s11 + $0x4] sm:$0x1]
    %v441 = vld [vmem:[%s12] sm:$0x3]
    %v443 = vsel %vm127, %v441, 0
    %445 = vmatprep.subr.bf16.mxu0 0
    %446 = vmatpush1.bf16.msra.mxu0 %v443
    %447 = vmatprep.subr.bf16.mxu0 0
    %448 = vmatpush1.bf16.msra.mxu0 0
    %449 = vmatprep.subr.bf16.mxu0 0
    %450 = vmatpush1.bf16.msra.mxu0 0
    %451 = vmatprep.subr.bf16.mxu0 0
    %452 = vmatpush1.bf16.msra.mxu0 0
    %453 = vmatprep.subr.bf16.mxu0 0
    %454 = vmatpush1.bf16.msra.mxu0 0
    %455 = vmatprep.subr.bf16.mxu0 0
    %456 = vmatpush1.bf16.msra.mxu0 0
    %457 = vmatprep.subr.bf16.mxu0 0
    %458 = vmatpush1.bf16.msra.mxu0 0
    %459 = vmatprep.subr.bf16.mxu0 0
    %460 = vmatpush1.bf16.msra.mxu0 0
    %461 = vmatprep.subr.bf16.mxu0 0
    %462 = vmatpush1.bf16.msra.mxu0 0
    %463 = vmatprep.subr.bf16.mxu0 0
    %464 = vmatpush1.bf16.msra.mxu0 0
    %465 = vmatprep.subr.bf16.mxu0 0
    %466 = vmatpush1.bf16.msra.mxu0 0
    %467 = vmatprep.subr.bf16.mxu0 0
    %468 = vmatpush1.bf16.msra.mxu0 0
    %469 = vmatprep.subr.bf16.mxu0 0
    %470 = vmatpush1.bf16.msra.mxu0 0
    %471 = vmatprep.subr.bf16.mxu0 0
    %472 = vmatpush1.bf16.msra.mxu0 0
    %473 = vmatprep.subr.bf16.mxu0 0
    %474 = vmatpush1.bf16.msra.mxu0 0
    %475 = vmatprep.subr.bf16.mxu0 0
    %476 = vmatpush1.bf16.msra.mxu0 0
    %477 = vmatprep.mubr.bf16.mxu0 0
    %478 = vmatmul.mubr.bf16.gmra.mrb[0].mxu0 %v125
    %v479 = vpop.f32.mrb[0].mxu0
    %v480 = vadd.f32 0.0, %v479
    %v481 = vpop.f32.mrb[0].mxu0
    %v482 = vpop.f32.mrb[0].mxu0
    %v483 = vpop.f32.mrb[0].mxu0
    %484 = vdwg.mxu0
    %v487 = vunpack.c.l.b16 %v439
    %v488 = vunpack.c.l.b16 %v440
    %v489 = vpack.c.b16 %v488, %v487
    %v491 = vsel %vm180, %v489, 0
    %493 = vmatprep.subr.bf16.mxu0 0
    %494 = vmatpush1.bf16.msra.mxu0 %v491
    %495 = vmatprep.subr.bf16.mxu0 0
    %496 = vmatpush1.bf16.msra.mxu0 0
    %497 = vmatprep.subr.bf16.mxu0 0
    %498 = vmatpush1.bf16.msra.mxu0 0
    %499 = vmatprep.subr.bf16.mxu0 0
    %500 = vmatpush1.bf16.msra.mxu0 0
    %501 = vmatprep.subr.bf16.mxu0 0
    %502 = vmatpush1.bf16.msra.mxu0 0
    %503 = vmatprep.subr.bf16.mxu0 0
    %504 = vmatpush1.bf16.msra.mxu0 0
    %505 = vmatprep.subr.bf16.mxu0 0
    %506 = vmatpush1.bf16.msra.mxu0 0
    %507 = vmatprep.subr.bf16.mxu0 0
    %508 = vmatpush1.bf16.msra.mxu0 0
    %509 = vmatprep.subr.bf16.mxu0 0
    %510 = vmatpush1.bf16.msra.mxu0 0
    %511 = vmatprep.subr.bf16.mxu0 0
    %512 = vmatpush1.bf16.msra.mxu0 0
    %513 = vmatprep.subr.bf16.mxu0 0
    %514 = vmatpush1.bf16.msra.mxu0 0
    %515 = vmatprep.subr.bf16.mxu0 0
    %516 = vmatpush1.bf16.msra.mxu0 0
    %517 = vmatprep.subr.bf16.mxu0 0
    %518 = vmatpush1.bf16.msra.mxu0 0
    %519 = vmatprep.subr.bf16.mxu0 0
    %520 = vmatpush1.bf16.msra.mxu0 0
    %521 = vmatprep.subr.bf16.mxu0 0
    %522 = vmatpush1.bf16.msra.mxu0 0
    %523 = vmatprep.subr.bf16.mxu0 0
    %524 = vmatpush1.bf16.msra.mxu0 0
    %525 = vmatprep.mubr.bf16.mxu0 0
    %526 = vmatmul.mubr.bf16.gmra.mrb[0].mxu0 %v178
    %v527 = vpop.f32.mrb[0].mxu0
    %v528 = vadd.f32 %v480, %v527
    %v529 = vpop.f32.mrb[0].mxu0
    %v530 = vpop.f32.mrb[0].mxu0
    %v531 = vpop.f32.mrb[0].mxu0
    %532 = vdwg.mxu0
    %v533 = vld [vmem:[%s13] sm:$0x1]
    %v535 = vlaneseq
    %v536 = vshrl.u32 %v535, 7
    %v537 = vsub.s32 0, %v536
    %v538 = vrot.slane %v533, %v537
    %v540 = vadd.f32 %v528, %v538
    %v541 = vmax.f32 %v540, 0.0
    %v542 = vpack.c.bf16 %v541, %v541
    %v543 = vld [vmem:[%s14] sm:$0xf]
    %v544 = vld [vmem:[%s14 + $0x4] sm:$0xf]
    %v545 = vld [vmem:[%s14 + $0x8] sm:$0xf]
    %v546 = vld [vmem:[%s14 + $0xc] sm:$0xf]
    %v547 = vld [vmem:[%s15] sm:$0x1]
    %v549 = vlaneseq
    %v550 = vshrl.u32 %v549, 7
    %v551 = vsub.s32 0, %v550
    %v552 = vrot.slane %v547, %v551
    %v558 = vunpack.c.l.b16 %v543
    %v559 = vunpack.c.l.b16 %v544
    %v560 = vunpack.c.l.b16 %v545
    %v561 = vunpack.c.l.b16 %v546
    %v562 = vpack.c.b16 %v559, %v558
    %v563 = vpack.c.b16 %v561, %v560
    %v567 = vsel %vm312, %v542, 0
    %569 = vmatprep.subr.bf16.mxu0 0
    %570 = vmatpush1.bf16.msra.mxu0 %v562
    %571 = vmatprep.subr.bf16.mxu0 0
    %572 = vmatpush1.bf16.msra.mxu0 %v563
    %573 = vmatprep.subr.bf16.mxu0 0
    %574 = vmatpush1.bf16.msra.mxu0 0
    %575 = vmatprep.subr.bf16.mxu0 0
    %576 = vmatpush1.bf16.msra.mxu0 0
    %577 = vmatprep.subr.bf16.mxu0 0
    %578 = vmatpush1.bf16.msra.mxu0 0
    %579 = vmatprep.subr.bf16.mxu0 0
    %580 = vmatpush1.bf16.msra.mxu0 0
    %581 = vmatprep.subr.bf16.mxu0 0
    %582 = vmatpush1.bf16.msra.mxu0 0
    %583 = vmatprep.subr.bf16.mxu0 0
    %584 = vmatpush1.bf16.msra.mxu0 0
    %585 = vmatprep.subr.bf16.mxu0 0
    %586 = vmatpush1.bf16.msra.mxu0 0
    %587 = vmatprep.subr.bf16.mxu0 0
    %588 = vmatpush1.bf16.msra.mxu0 0
    %589 = vmatprep.subr.bf16.mxu0 0
    %590 = vmatpush1.bf16.msra.mxu0 0
    %591 = vmatprep.subr.bf16.mxu0 0
    %592 = vmatpush1.bf16.msra.mxu0 0
    %593 = vmatprep.subr.bf16.mxu0 0
    %594 = vmatpush1.bf16.msra.mxu0 0
    %595 = vmatprep.subr.bf16.mxu0 0
    %596 = vmatpush1.bf16.msra.mxu0 0
    %597 = vmatprep.subr.bf16.mxu0 0
    %598 = vmatpush1.bf16.msra.mxu0 0
    %599 = vmatprep.subr.bf16.mxu0 0
    %600 = vmatpush1.bf16.msra.mxu0 0
    %601 = vmatprep.mubr.bf16.mxu0 0
    %602 = vmatmul.mubr.bf16.gmra.mrb[0].mxu0 %v567
    %v603 = vpop.f32.mrb[0].mxu0
    %v604 = vadd.f32 %v552, %v603
    %v605 = vpop.f32.mrb[0].mxu0
    %v606 = vpop.f32.mrb[0].mxu0
    %v607 = vpop.f32.mrb[0].mxu0
    %608 = vdwg.mxu0
    %v609 = vmax.f32 %v604, 0.0
    %v610 = vpack.c.bf16 %v609, %v609
    %v611 = vld [vmem:[%s16] sm:$0xf]
    %v612 = vld [vmem:[%s16 + $0x4] sm:$0xf]
    %v613 = vld [vmem:[%s16 + $0x8] sm:$0xf]
    %v614 = vld [vmem:[%s16 + $0xc] sm:$0xf]
    %v615 = vld [vmem:[#allocation3] sm:$0x1]
    %v617 = vlaneseq
    %v618 = vshrl.u32 %v617, 7
    %v619 = vsub.s32 0, %v618
    %v620 = vrot.slane %v615, %v619
    %v626 = vunpack.c.l.b16 %v611
    %v627 = vunpack.c.l.b16 %v612
    %v628 = vunpack.c.l.b16 %v613
    %v629 = vunpack.c.l.b16 %v614
    %v630 = vpack.c.b16 %v627, %v626
    %v631 = vpack.c.b16 %v629, %v628
    %v635 = vsel %vm312, %v610, 0
    %637 = vmatprep.subr.bf16.mxu0 0
    %638 = vmatpush1.bf16.msra.mxu0 %v630
    %639 = vmatprep.subr.bf16.mxu0 0
    %640 = vmatpush1.bf16.msra.mxu0 %v631
    %641 = vmatprep.subr.bf16.mxu0 0
    %642 = vmatpush1.bf16.msra.mxu0 0
    %643 = vmatprep.subr.bf16.mxu0 0
    %644 = vmatpush1.bf16.msra.mxu0 0
    %645 = vmatprep.subr.bf16.mxu0 0
    %646 = vmatpush1.bf16.msra.mxu0 0
    %647 = vmatprep.subr.bf16.mxu0 0
    %648 = vmatpush1.bf16.msra.mxu0 0
    %649 = vmatprep.subr.bf16.mxu0 0
    %650 = vmatpush1.bf16.msra.mxu0 0
    %651 = vmatprep.subr.bf16.mxu0 0
    %652 = vmatpush1.bf16.msra.mxu0 0
    %653 = vmatprep.subr.bf16.mxu0 0
    %654 = vmatpush1.bf16.msra.mxu0 0
    %655 = vmatprep.subr.bf16.mxu0 0
    %656 = vmatpush1.bf16.msra.mxu0 0
    %657 = vmatprep.subr.bf16.mxu0 0
    %658 = vmatpush1.bf16.msra.mxu0 0
    %659 = vmatprep.subr.bf16.mxu0 0
    %660 = vmatpush1.bf16.msra.mxu0 0
    %661 = vmatprep.subr.bf16.mxu0 0
    %662 = vmatpush1.bf16.msra.mxu0 0
    %663 = vmatprep.subr.bf16.mxu0 0
    %664 = vmatpush1.bf16.msra.mxu0 0
    %665 = vmatprep.subr.bf16.mxu0 0
    %666 = vmatpush1.bf16.msra.mxu0 0
    %667 = vmatprep.subr.bf16.mxu0 0
    %668 = vmatpush1.bf16.msra.mxu0 0
    %669 = vmatprep.mubr.bf16.mxu0 0
    %670 = vmatmul.mubr.bf16.gmra.mrb[0].mxu0 %v635
    %v671 = vpop.f32.mrb[0].mxu0
    %v672 = vadd.f32 %v620, %v671
    %v673 = vpop.f32.mrb[0].mxu0
    %v674 = vpop.f32.mrb[0].mxu0
    %v675 = vpop.f32.mrb[0].mxu0
    %676 = vdwg.mxu0
    %v677 = vsub.f32 0.0, %v672
    %v678 = vmul.f32 %v677, 1.442695
    %v679 = vpow.pop %v678
    %v680 = vadd.f32 %v679, 1.0
    %v681 = vrcp.pop %v680
    %v682 = vmul.f32 1.0, %v681
    %v683 = vsub.f32 1.0, %v682
    %685 = vrot.lane.b32.xlu0 %v682, 1
    %v686 = vpop.permute.xlu0 %685
    %v688 = vsel %vm435, %v683, %v686
    %689 = vst.msk [vmem:[#allocation13] sm:$0x3] %vm437, %v688
    // Predicated region
    $region90: #{tpu_custom_call.1} parent=1 // pred_check
      _
    $region91: #{tpu_custom_call.1} parent=1 // pred_check_branch
      %691 = sbr.rel (0) target = $region93
    $region92: #{tpu_custom_call.1} parent=1 // pred_region
      %s693 = ssub.s32 32, 32
      %694 = vsyncadd [#allocation6], %s693
      %s696 = sshll.u32 [#allocation12], 4
      %s697 = int_to_ptr.vmem [resolvable:$true] %s696
      %699 = dma.vmem_to_hbm [thread:$0]  %s697, 32, %s18, [#allocation6]
    $region93: #{tpu_custom_call.1} parent=1 // pred_fallthru
      _
    // Predicated region
    $region94: #{tpu_custom_call.1} parent=1 // pred_check
      _
    $region95: #{tpu_custom_call.1} parent=1 // pred_check_branch
      %701 = sbr.rel (0) target = $region97
    $region96: #{tpu_custom_call.1} parent=1 // pred_region
      %s703 = ssub.s32 32, 32
      %704 = vsyncadd [#allocation14], %s703
      %s706 = sshll.u32 [#allocation13], 4
      %s707 = int_to_ptr.vmem [resolvable:$true] %s706
      %709 = dma.vmem_to_hbm [thread:$0]  %s707, 32, %s19, [#allocation14]
    $region97: #{tpu_custom_call.1} parent=1 // pred_fallthru
      _
    // Predicated region
    $region98: #{tpu_custom_call.1} parent=1 // pred_check
      _
    $region99: #{tpu_custom_call.1} parent=1 // pred_check_branch
      %711 = sbr.rel (0) target = $region101
    $region100: #{tpu_custom_call.1} parent=1 // pred_region
      %712 = dma.done [#allocation6], 32
    $region101: #{tpu_custom_call.1} parent=1 // pred_fallthru
      _
    // Predicated region
    $region102: #{tpu_custom_call.1} parent=1 // pred_check
      _
    $region103: #{tpu_custom_call.1} parent=1 // pred_check_branch
      %714 = sbr.rel (0) target = $region105
    $region104: #{tpu_custom_call.1} parent=1 // pred_region
      %715 = dma.done [#allocation14], 32
    $region105: #{tpu_custom_call.1} parent=1 // pred_fallthru
      _
    %716 = vsyncpa [#allocation5], 1
    %717 = vsyncpa [#allocation8], 1
    %718 = vsyncpa [#allocation11], 1
    %719 = vsyncpa [#allocation6], 1
    %720 = vsyncpa [#allocation14], 1

</llo_original>
